<compile_context>
chip_gen: v7x
topology: tpu7x:2x2x1
jax: 0.10.0
libtpu: 0.0.40
codegen_flags: <defaults>
</compile_context>

<pallas_src>
import jax
import jax.numpy as jnp
from jax.experimental import pallas as pl
from jax.experimental.pallas import tpu as pltpu


# ----------------------------- kernels --------------------------------------


def _binary_activation_bias_kernel(x_ref, bias_ref, o_ref):
    # is_dec=False path: biasNI = trunc(clamp(bias, max=-1))
    # (.int().float() on values <= -1 is truncation toward zero)
    bni = jnp.trunc(jnp.minimum(bias_ref[...], -1.0))          # (1, F)
    y = jnp.round(jnp.clip(x_ref[...] + bni, 0.0, 1.0))        # (TB, F)
    o_ref[...] = y.astype(o_ref.dtype)


def _binary_activation_nobias_kernel(x_ref, o_ref):
    # is_dec=True path: biasNI == 0, so out = round(clip(x, 0, 1))
    y = jnp.round(jnp.clip(x_ref[...], 0.0, 1.0))
    o_ref[...] = y.astype(o_ref.dtype)


# ----------------------------- wrapper ---------------------------------------


_BLOCK_BYTES = 8 * 1024 * 1024        # target bytes per input block
_VMEM_LIMIT_BYTES = 48 * 1024 * 1024  # 2 bufs * (in + out) * 8 MiB = 32 MiB + slack


def _sublane(itemsize: int) -> int:
    # sublane packing: 8 for 4-byte, 16 for 2-byte, 32 for 1-byte dtypes
    return max(8, 32 // max(itemsize, 1))


def _pick_tile_rows(batch: int, features: int, itemsize: int) -> int:
    """Rows per block: dtype-aware sublane multiple, sized to ~_BLOCK_BYTES,
    capped so the grid keeps >=2 steps when the batch allows it (v7x megacore
    sharding); the cap only bites when the whole batch fits in one block."""
    sub = _sublane(itemsize)
    rows_budget = _BLOCK_BYTES // (max(features, 1) * itemsize)
    tb = max(sub, (rows_budget // sub) * sub)
    b_up = -(-batch // sub) * sub
    tb = min(tb, b_up)
    if b_up >= 2 * sub:
        half = -(-(b_up // 2) // sub) * sub
        tb = min(tb, max(sub, half))
    return tb


def binary_activation(x: jax.Array, bias: jax.Array, is_dec: bool) -> jax.Array:
    """x: (B, F), bias: (F,), is_dec: static Python bool."""
    B, F = x.shape
    is_dec = bool(is_dec)
    itemsize = jnp.dtype(x.dtype).itemsize

    cparams = pltpu.CompilerParams(
        dimension_semantics=("parallel",),
        vmem_limit_bytes=_VMEM_LIMIT_BYTES,
    )

    if is_dec:
        # biasNI is identically zero -> pure elementwise op on x.
        # If F is not lane-dense, re-view the contiguous (B, F) buffer as a
        # (R, 128) slab (free reshape) so stores stay unmasked vst.
        R, C = B, F
        if F % 128 != 0 and (B * F) % 128 == 0:
            R, C = (B * F) // 128, 128
        xv = x.reshape(R, C)
        tb = _pick_tile_rows(R, C, itemsize)
        out = pl.pallas_call(
            _binary_activation_nobias_kernel,
            out_shape=jax.ShapeDtypeStruct((R, C), x.dtype),
            grid=(pl.cdiv(R, tb),),
            in_specs=[pl.BlockSpec((tb, C), lambda i: (i, 0))],
            out_specs=pl.BlockSpec((tb, C), lambda i: (i, 0)),
            compiler_params=cparams,
        )(xv)
        return out.reshape(B, F)

    # is_dec=False: per-feature bias; keep features on the lane axis.
    # TODO(synk): if F is not a multiple of 128 the output store is a masked
    # vst.msk; lane-padding the feature axis would need an extra copy, so it is
    # left as-is (F=128 here is lane-dense).
    tb = _pick_tile_rows(B, F, itemsize)
    bias2d = bias.reshape(1, F)
    out = pl.pallas_call(
        _binary_activation_bias_kernel,
        out_shape=jax.ShapeDtypeStruct((B, F), x.dtype),
        grid=(pl.cdiv(B, tb),),
        in_specs=[
            pl.BlockSpec((tb, F), lambda i: (i, 0)),
            pl.BlockSpec((1, F), lambda i: (0, 0)),
        ],
        out_specs=pl.BlockSpec((tb, F), lambda i: (i, 0)),
        compiler_params=cparams,
    )(x, bias2d)
    return out


# ----------------------------- reference -------------------------------------


def binary_activation_ref(x, bias, is_dec):
    """Pure-JAX reference mirroring the PyTorch module."""
    if is_dec:
        bni = jnp.clip(bias, 0.0, 0.0)
    else:
        bni = jnp.minimum(bias, -1.0)
    bni = jnp.trunc(bni)
    return jnp.round(jnp.clip(x + bni[None, :], 0.0, 1.0))


# ----------------------------- demo / test ------------------------------------


if __name__ == "__main__":
    SIZE = 128  # module __init__ takes `size` -> bias shape (SIZE,)

    key = jax.random.PRNGKey(0)
    kx1, kx2 = jax.random.split(key)

    # Deterministic parameter init, exactly as in __init__: bias = -ones(size)
    bias = -jnp.ones((SIZE,), dtype=jnp.float32)

    ok = True
    # B=8 (single block) and B=12 (2-step grid with a ragged/masked last block)
    for B, kx in ((8, kx1), (12, kx2)):
        x = jax.random.uniform(kx, (B, SIZE), dtype=jnp.float32,
                               minval=-1.0, maxval=2.0)
        for is_dec in (True, False):
            out = binary_activation(x, bias, is_dec)
            out = jax.block_until_ready(out)
            ref = binary_activation_ref(x, bias, is_dec)
            ok = ok and bool(jnp.array_equal(out, ref))

    if ok:
        print("KERNEL_OK")
    else:
        raise SystemExit("mismatch vs reference")
</pallas_src>

<mosaic_0001>
module attributes {stable_mosaic.version = 11 : i64} {
  func.func @_binary_activation_nobias_kernel(%arg0: i32, %arg1: memref<8x128xf32, #tpu.memory_space<vmem>>, %arg2: memref<8x128xf32, #tpu.memory_space<vmem>>) attributes {dimension_semantics = [#tpu.dimension_semantics<parallel>], iteration_bounds = array<i64: 1>, scalar_prefetch = 0 : i64, scratch_operands = 0 : i64, tpu.core_type = #tpu.core_type<tc>, window_params = [{transform_indices = @transform_0, window_bounds = array<i64: 8, 128>}, {transform_indices = @transform_1, window_bounds = array<i64: 8, 128>}]} {
    %c0 = arith.constant 0 : index
    %c0_0 = arith.constant 0 : index
    %0 = vector.load %arg1[%c0, %c0_0] : memref<8x128xf32, #tpu.memory_space<vmem>>, vector<8x128xf32>
    %cst = arith.constant 0.000000e+00 : f32
    %cst_1 = arith.constant 1.000000e+00 : f32
    %1 = vector.broadcast %cst : f32 to vector<8x128xf32>
    %2 = arith.maximumf %1, %0 : vector<8x128xf32>
    %3 = vector.broadcast %cst_1 : f32 to vector<8x128xf32>
    %4 = arith.minimumf %3, %2 : vector<8x128xf32>
    %5 = math.roundeven %4 : vector<8x128xf32>
    %c0_2 = arith.constant 0 : index
    %c0_3 = arith.constant 0 : index
    %6 = vector.load %arg2[%c0_2, %c0_3] : memref<8x128xf32, #tpu.memory_space<vmem>>, vector<8x128xf32>
    tpu.vector_store %arg2[%c0_2, %c0_3], %5 {strides = array<i32>} : memref<8x128xf32, #tpu.memory_space<vmem>>, vector<8x128xf32>,
    return
  }
  func.func @transform_0(%arg0: i32) -> (i32, i32) {
    %c0_i32 = arith.constant 0 : i32
    %c0_i32_0 = arith.constant 0 : i32
    return %arg0, %c0_i32 : i32, i32
  }
  func.func @transform_1(%arg0: i32) -> (i32, i32) {
    %c0_i32 = arith.constant 0 : i32
    %c0_i32_0 = arith.constant 0 : i32
    return %arg0, %c0_i32 : i32, i32
  }
}

</mosaic_0001>

<llo_original>
// kernel: tpu_custom_call.1
$region0: #{tpu_custom_call.1}
  #allocation0 [shape = 'u32[]', space=smem, size = 0x4, offset = 0x4, fixed_abs, tag = 'smem constant byte address 0x4 - core index']
  #allocation1 [shape = 'u32[144,128]{1,0:T(1,128)}', space=vmem, size = 0x12000, scoped, tag = 'internal scratch']
  %s0 = inlined_call_operand.hbm [shape: f32[8,128], index: 0, kind: input, shape index: {}]
  %s1 = inlined_call_operand.hbm [shape: f32[8,128], index: 1, kind: output, shape index: {}]
  %s2 = sld [smem:[#allocation0]]
  $region18: #{tpu_custom_call.1} parent=0
    _
  %s4 = ssub.s32 1, %s2
  %s5 = scalar_select 0, %s4, %s2
  $region1: #{tpu_custom_call.1} parent=0
    #allocation2 [shape = 'u8[4096]{0}', space=vmem, size = 0x1000, scoped, tag = 'input window, operand 0, single buffered']
    #allocation3 [shape = 's32[1]{0}', space=sflag, size = 0x4, scoped, tag = 'scoped memory for tpu_custom_call.1']
    #allocation4 [shape = 's32[1]{0}', space=sflag, size = 0x4, scoped, tag = 'scoped memory for tpu_custom_call.1']
    #allocation5 [shape = 'u8[4096]{0}', space=vmem, size = 0x1000, scoped, tag = 'output window, operand 0, single buffered']
    %6 = vsyncpa [#allocation3], 0
    %7 = vsyncpa [#allocation4], 0
    // Predicated region
    $region2: #{tpu_custom_call.1} parent=1 // pred_check
      _
    $region3: #{tpu_custom_call.1} parent=1 // pred_check_branch
      %9 = sbr.rel (0) target = $region5
    $region4: #{tpu_custom_call.1} parent=1 // pred_region
      %s11 = ssub.s32 128, 128
      %12 = vsyncadd [#allocation3], %s11
      %s14 = sshll.u32 [#allocation2], 4
      %s15 = int_to_ptr.vmem [resolvable:$true] %s14
      %17 = dma.hbm_to_vmem [thread:$0]  %s0, 128, %s15, [#allocation3]
    $region5: #{tpu_custom_call.1} parent=1 // pred_fallthru
      _
    // Predicated region
    $region6: #{tpu_custom_call.1} parent=1 // pred_check
      _
    $region7: #{tpu_custom_call.1} parent=1 // pred_check_branch
      %19 = sbr.rel (0) target = $region9
    $region8: #{tpu_custom_call.1} parent=1 // pred_region
      %20 = dma.done [#allocation3], 128
    $region9: #{tpu_custom_call.1} parent=1 // pred_fallthru
      _
    %v21 = vld [vmem:[#allocation2] sm:$0xff]
    %v22 = vmax.f32 %v21, 0.0
    %v23 = vmin.f32 %v22, 1.0
    %v24 = vround.ne.pseudo %v23
    %25 = vst [vmem:[#allocation5] sm:$0xff] %v24
    // Predicated region
    $region10: #{tpu_custom_call.1} parent=1 // pred_check
      _
    $region11: #{tpu_custom_call.1} parent=1 // pred_check_branch
      %27 = sbr.rel (0) target = $region13
    $region12: #{tpu_custom_call.1} parent=1 // pred_region
      %s29 = ssub.s32 128, 128
      %30 = vsyncadd [#allocation4], %s29
      %s32 = sshll.u32 [#allocation5], 4
      %s33 = int_to_ptr.vmem [resolvable:$true] %s32
      %35 = dma.vmem_to_hbm [thread:$0]  %s33, 128, %s1, [#allocation4]
    $region13: #{tpu_custom_call.1} parent=1 // pred_fallthru
      _
    // Predicated region
    $region14: #{tpu_custom_call.1} parent=1 // pred_check
      _
    $region15: #{tpu_custom_call.1} parent=1 // pred_check_branch
      %37 = sbr.rel (0) target = $region17
    $region16: #{tpu_custom_call.1} parent=1 // pred_region
      %38 = dma.done [#allocation4], 128
    $region17: #{tpu_custom_call.1} parent=1 // pred_fallthru
      _
    %39 = vsyncpa [#allocation3], 1
    %40 = vsyncpa [#allocation4], 1

</llo_original>
